<compile_context>
chip_gen: v7x
topology: tpu7x:2x2x1
jax: 0.10.0
libtpu: 0.0.40
codegen_flags: <defaults>
</compile_context>

<pallas_src>
import jax
import jax.numpy as jnp
from jax.experimental import pallas as pl
from jax.experimental.pallas import tpu as pltpu

# ---------------- config (small shapes consistent with the module) ----------
NUM_OBS = 16
NUM_ACTIONS = 4
NUM_POLICIES = 3
HIDDEN = 32          # model_params hidden width for DeepQNet
BATCH = 8            # fill the 8-sublane vreg dimension

H_REAL = NUM_POLICIES * HIDDEN          # 96 real fused hidden units
H_FUSED = 128                           # +1 constant unit, padded to 128 lanes
OUT_FUSED = NUM_POLICIES * NUM_ACTIONS  # 12


# ---------------- fused Pallas kernel ----------------------------------------
def qrm_fused_kernel(x_ref, w1_ref, b1_ref, w2_ref, out_ref):
    """All policies' DeepQNets in one kernel body (no grid, 2 matmuls total).

    x_ref  : (B, NUM_OBS)
    w1_ref : (NUM_OBS, H_FUSED)   -- per-policy w1 concatenated + zero pad
    b1_ref : (1, H_FUSED)         -- per-policy b1 concatenated; [0,96]=1.0
    w2_ref : (H_FUSED, P*A)       -- block-diagonal per-policy w2; row 96 = b2
    out_ref: (B, P*A)             -- lane-contiguous slab, single store
    """
    x = x_ref[...]                                                   # (B, D)
    h = jnp.maximum(
        jnp.dot(x, w1_ref[...], preferred_element_type=jnp.float32)
        + b1_ref[...], 0.0)                                          # (B, 128)
    # h[:, 96] == 1 (constant unit) -> w2 row 96 injects the layer-2 bias.
    out_ref[...] = jnp.dot(h, w2_ref[...],
                           preferred_element_type=jnp.float32)       # (B, P*A)


# ---------------- static weight fusion (once, outside the hot path) ----------
def pack_params(params):
    """Fuse per-policy (w1,b1,w2,b2) into (w1_cat, b1_cat, w2_blk). Static prep."""
    P, D, H, A = NUM_POLICIES, NUM_OBS, HIDDEN, NUM_ACTIONS
    w1, b1, w2, b2 = params["w1"], params["b1"], params["w2"], params["b2"]

    w1_cat = jnp.zeros((D, H_FUSED), jnp.float32)
    b1_cat = jnp.zeros((1, H_FUSED), jnp.float32)
    w2_blk = jnp.zeros((H_FUSED, P * A), jnp.float32)
    for p in range(P):
        w1_cat = w1_cat.at[:, p * H:(p + 1) * H].set(w1[p])
        b1_cat = b1_cat.at[:, p * H:(p + 1) * H].set(b1[p, 0])
        # policy-major block-diagonal placement (parity with torch.stack(dim=1))
        w2_blk = w2_blk.at[p * H:(p + 1) * H, p * A:(p + 1) * A].set(w2[p])
        # fold b2[p] in via the constant hidden unit (row H_REAL)
        w2_blk = w2_blk.at[H_REAL, p * A:(p + 1) * A].set(b2[p, 0])
    b1_cat = b1_cat.at[0, H_REAL].set(1.0)   # relu(0*x + 1) == 1 constant unit
    # lanes 97..127: w1 cols = 0, b1 = 0 -> relu(0)=0; w2 rows = 0 -> no effect
    return {"w1": w1_cat, "b1": b1_cat, "w2": w2_blk}


# ---------------- wrapper -----------------------------------------------------
def qrm_net_forward(state, fused):
    """state: (B, NUM_OBS) float32  ->  (B, NUM_POLICIES, NUM_ACTIONS)."""
    b = state.shape[0]
    vmem = pl.BlockSpec(memory_space=pltpu.MemorySpace.VMEM)
    q_flat = pl.pallas_call(
        qrm_fused_kernel,
        out_shape=jax.ShapeDtypeStruct((b, OUT_FUSED), jnp.float32),
        in_specs=[vmem, vmem, vmem, vmem],
        out_specs=vmem,
        # NOTE: if B ever grows to hundreds of rows, add grid=(B//tile,) over
        # the batch with dimension_semantics=("parallel",) to use both v7x TCs.
    )(state, fused["w1"], fused["b1"], fused["w2"])
    # layout plumbing only: (B, P*A) -> (B, P, A)  == torch.stack(..., dim=1)
    return q_flat.reshape(b, NUM_POLICIES, NUM_ACTIONS)


# ---------------- pure-JAX reference (for correctness check) -----------------
def qrm_net_reference(state, params):
    qs = []
    for p in range(NUM_POLICIES):
        h = jax.nn.relu(state @ params["w1"][p] + params["b1"][p])
        qs.append(h @ params["w2"][p] + params["b2"][p])
    return jnp.stack(qs, axis=1)                                    # (B, P, A)


# ---------------- deterministic parameter init --------------------------------
def init_params(key):
    ks = jax.random.split(key, 4)
    s = 0.1

    def n(k, shape):
        return (s * jax.random.normal(k, shape)).astype(jnp.float32)

    return {
        "w1": n(ks[0], (NUM_POLICIES, NUM_OBS, HIDDEN)),
        "b1": n(ks[1], (NUM_POLICIES, 1, HIDDEN)),
        "w2": n(ks[2], (NUM_POLICIES, HIDDEN, NUM_ACTIONS)),
        "b2": n(ks[3], (NUM_POLICIES, 1, NUM_ACTIONS)),
    }


# ---------------- main ---------------------------------------------------------
if __name__ == "__main__":
    key = jax.random.PRNGKey(0)
    k_state, k_par = jax.random.split(key, 2)

    state = jax.random.normal(k_state, (BATCH, NUM_OBS), dtype=jnp.float32)
    params = init_params(k_par)
    fused = jax.tree_util.tree_map(jax.block_until_ready, pack_params(params))

    q_values = qrm_net_forward(state, fused)
    q_values = jax.block_until_ready(q_values)

    assert q_values.shape == (BATCH, NUM_POLICIES, NUM_ACTIONS), q_values.shape
    assert q_values.dtype == jnp.float32
    assert bool(jnp.all(jnp.isfinite(q_values)))

    q_ref = qrm_net_reference(state, params)
    assert bool(jnp.allclose(q_values, q_ref, atol=1e-3, rtol=1e-3)), \
        float(jnp.max(jnp.abs(q_values - q_ref)))

    print("KERNEL_OK")
</pallas_src>

<mosaic_0001>
module attributes {stable_mosaic.version = 11 : i64} {
  func.func @qrm_fused_kernel(%arg0: memref<8x16xf32, #tpu.memory_space<vmem>>, %arg1: memref<16x128xf32, #tpu.memory_space<vmem>>, %arg2: memref<1x128xf32, #tpu.memory_space<vmem>>, %arg3: memref<128x12xf32, #tpu.memory_space<vmem>>, %arg4: memref<8x12xf32, #tpu.memory_space<vmem>>) attributes {dimension_semantics = [], scalar_prefetch = 0 : i64, scratch_operands = 0 : i64, tpu.core_type = #tpu.core_type<tc>} {
    %c0 = arith.constant 0 : index
    %c0_0 = arith.constant 0 : index
    %0 = vector.load %arg0[%c0, %c0_0] : memref<8x16xf32, #tpu.memory_space<vmem>>, vector<8x16xf32>
    %c0_1 = arith.constant 0 : index
    %c0_2 = arith.constant 0 : index
    %1 = vector.load %arg1[%c0_1, %c0_2] : memref<16x128xf32, #tpu.memory_space<vmem>>, vector<16x128xf32>
    %cst = arith.constant dense<0.000000e+00> : vector<8x128xf32>
    %2 = tpu.matmul %0, %1, %cst {dimension_numbers = #tpu.dot_dimension_numbers<[1], [0], [0], [1], [0, 0, 1, 1], [], []>} : vector<8x16xf32>, vector<16x128xf32>, vector<8x128xf32> -> vector<8x128xf32>
    %c0_3 = arith.constant 0 : index
    %c0_4 = arith.constant 0 : index
    %3 = vector.load %arg2[%c0_3, %c0_4] : memref<1x128xf32, #tpu.memory_space<vmem>>, vector<1x128xf32>
    %4 = vector.broadcast %3 : vector<1x128xf32> to vector<8x128xf32>
    %5 = arith.addf %2, %4 : vector<8x128xf32>
    %cst_5 = arith.constant 0.000000e+00 : f32
    %6 = vector.broadcast %cst_5 : f32 to vector<8x128xf32>
    %7 = arith.maximumf %5, %6 : vector<8x128xf32>
    %c0_6 = arith.constant 0 : index
    %c0_7 = arith.constant 0 : index
    %8 = vector.load %arg3[%c0_6, %c0_7] : memref<128x12xf32, #tpu.memory_space<vmem>>, vector<128x12xf32>
    %cst_8 = arith.constant dense<0.000000e+00> : vector<8x12xf32>
    %9 = tpu.matmul %7, %8, %cst_8 {dimension_numbers = #tpu.dot_dimension_numbers<[1], [0], [0], [1], [0, 0, 1, 1], [], []>} : vector<8x128xf32>, vector<128x12xf32>, vector<8x12xf32> -> vector<8x12xf32>
    %c0_9 = arith.constant 0 : index
    %c0_10 = arith.constant 0 : index
    %10 = vector.load %arg4[%c0_9, %c0_10] : memref<8x12xf32, #tpu.memory_space<vmem>>, vector<8x12xf32>
    tpu.vector_store %arg4[%c0_9, %c0_10], %9 {strides = array<i32>} : memref<8x12xf32, #tpu.memory_space<vmem>>, vector<8x12xf32>,
    return
  }
}

</mosaic_0001>

<llo_original>
// kernel: tpu_custom_call.1
$region0: #{tpu_custom_call.1}
  #allocation0 [shape = 'u32[]', space=smem, size = 0x4, offset = 0x4, fixed_abs, tag = 'smem constant byte address 0x4 - core index']
  #allocation1 [shape = 'u32[144,128]{1,0:T(1,128)}', space=vmem, size = 0x12000, scoped, tag = 'internal scratch']
  %s0 = inlined_call_operand.vmem [shape: f32[8,16], index: 0, kind: input, shape index: {}]
  %s1 = inlined_call_operand.vmem [shape: f32[16,128], index: 1, kind: input, shape index: {}]
  %s2 = inlined_call_operand.vmem [shape: f32[1,128], index: 2, kind: input, shape index: {}]
  %s3 = inlined_call_operand.vmem [shape: f32[128,12], index: 3, kind: input, shape index: {}]
  %s4 = inlined_call_operand.hbm [shape: f32[8,12], index: 4, kind: output, shape index: {}]
  %s5 = sld [smem:[#allocation0]]
  $region26: #{tpu_custom_call.1} parent=0
    _
  %s7 = ssub.s32 1, %s5
  %s8 = scalar_select 0, %s7, %s5
  $region1: #{tpu_custom_call.1} parent=0
    #allocation2 [shape = 'u8[4096]{0}', space=vmem, size = 0x1000, scoped, tag = 'output window, operand 0, single buffered']
    #allocation3 [shape = 's32[1]{0}', space=sflag, size = 0x4, scoped, tag = 'scoped memory for tpu_custom_call.1']
    %9 = vsyncpa [#allocation3], 0
    // Predicated region
    $region2: #{tpu_custom_call.1} parent=1 // pred_check
      _
    $region3: #{tpu_custom_call.1} parent=1 // pred_check_branch
      %11 = sbr.rel (0) target = $region5
    $region4: #{tpu_custom_call.1} parent=1 // pred_region
      _
    $region5: #{tpu_custom_call.1} parent=1 // pred_fallthru
      _
    // Predicated region
    $region6: #{tpu_custom_call.1} parent=1 // pred_check
      _
    $region7: #{tpu_custom_call.1} parent=1 // pred_check_branch
      %13 = sbr.rel (0) target = $region9
    $region8: #{tpu_custom_call.1} parent=1 // pred_region
      _
    $region9: #{tpu_custom_call.1} parent=1 // pred_fallthru
      _
    // Predicated region
    $region10: #{tpu_custom_call.1} parent=1 // pred_check
      _
    $region11: #{tpu_custom_call.1} parent=1 // pred_check_branch
      %15 = sbr.rel (0) target = $region13
    $region12: #{tpu_custom_call.1} parent=1 // pred_region
      _
    $region13: #{tpu_custom_call.1} parent=1 // pred_fallthru
      _
    // Predicated region
    $region14: #{tpu_custom_call.1} parent=1 // pred_check
      _
    $region15: #{tpu_custom_call.1} parent=1 // pred_check_branch
      %17 = sbr.rel (0) target = $region17
    $region16: #{tpu_custom_call.1} parent=1 // pred_region
      _
    $region17: #{tpu_custom_call.1} parent=1 // pred_fallthru
      _
    %v18 = vld [vmem:[%s0] sm:$0xff]
    %v19 = vld [vmem:[%s1] sm:$0xff]
    %v20 = vld [vmem:[%s1 + $0x8] sm:$0xff]
    %v21 = vld [vmem:[%s2] sm:$0x1]
    %v23 = vlaneseq
    %v24 = vshrl.u32 %v23, 7
    %v25 = vsub.s32 0, %v24
    %v26 = vrot.slane %v21, %v25
    %vm28 = vcmask 130048
    %v30 = vsel %vm28, %v18, 0
    %32 = vmatprep.subr.mxu0 0.0
    %33 = vmatpush1.msra.mxu0 %v19
    %34 = vmatprep.subr.mxu0 0.0
    %35 = vmatpush1.msra.mxu0 %v20
    %36 = vmatprep.subr.mxu0 0.0
    %37 = vmatpush1.msra.mxu0 0.0
    %38 = vmatprep.subr.mxu0 0.0
    %39 = vmatpush1.msra.mxu0 0.0
    %40 = vmatprep.subr.mxu0 0.0
    %41 = vmatpush1.msra.mxu0 0.0
    %42 = vmatprep.subr.mxu0 0.0
    %43 = vmatpush1.msra.mxu0 0.0
    %44 = vmatprep.subr.mxu0 0.0
    %45 = vmatpush1.msra.mxu0 0.0
    %46 = vmatprep.subr.mxu0 0.0
    %47 = vmatpush1.msra.mxu0 0.0
    %48 = vmatprep.subr.mxu0 0.0
    %49 = vmatpush1.msra.mxu0 0.0
    %50 = vmatprep.subr.mxu0 0.0
    %51 = vmatpush1.msra.mxu0 0.0
    %52 = vmatprep.subr.mxu0 0.0
    %53 = vmatpush1.msra.mxu0 0.0
    %54 = vmatprep.subr.mxu0 0.0
    %55 = vmatpush1.msra.mxu0 0.0
    %56 = vmatprep.subr.mxu0 0.0
    %57 = vmatpush1.msra.mxu0 0.0
    %58 = vmatprep.subr.mxu0 0.0
    %59 = vmatpush1.msra.mxu0 0.0
    %60 = vmatprep.subr.mxu0 0.0
    %61 = vmatpush1.msra.mxu0 0.0
    %62 = vmatprep.subr.mxu0 0.0
    %63 = vmatpush1.msra.mxu0 0.0
    %64 = vmatprep.subr.mxu0 0.0
    %65 = vmatpush1.msra.mxu0 0.0
    %66 = vmatprep.subr.mxu0 0.0
    %67 = vmatpush1.msra.mxu0 0.0
    %68 = vmatprep.subr.mxu0 0.0
    %69 = vmatpush1.msra.mxu0 0.0
    %70 = vmatprep.subr.mxu0 0.0
    %71 = vmatpush1.msra.mxu0 0.0
    %72 = vmatprep.subr.mxu0 0.0
    %73 = vmatpush1.msra.mxu0 0.0
    %74 = vmatprep.subr.mxu0 0.0
    %75 = vmatpush1.msra.mxu0 0.0
    %76 = vmatprep.subr.mxu0 0.0
    %77 = vmatpush1.msra.mxu0 0.0
    %78 = vmatprep.subr.mxu0 0.0
    %79 = vmatpush1.msra.mxu0 0.0
    %80 = vmatprep.subr.mxu0 0.0
    %81 = vmatpush1.msra.mxu0 0.0
    %82 = vmatprep.subr.mxu0 0.0
    %83 = vmatpush1.msra.mxu0 0.0
    %84 = vmatprep.subr.mxu0 0.0
    %85 = vmatpush1.msra.mxu0 0.0
    %86 = vmatprep.subr.mxu0 0.0
    %87 = vmatpush1.msra.mxu0 0.0
    %88 = vmatprep.subr.mxu0 0.0
    %89 = vmatpush1.msra.mxu0 0.0
    %90 = vmatprep.subr.mxu0 0.0
    %91 = vmatpush1.msra.mxu0 0.0
    %92 = vmatprep.subr.mxu0 0.0
    %93 = vmatpush1.msra.mxu0 0.0
    %94 = vmatprep.subr.mxu0 0.0
    %95 = vmatpush1.msra.mxu0 0.0
    %96 = vmatprep.mubr.f32.mxu0 0.0
    %97 = vmatmul.mubr.f32.gmra.mrb[0].mxu0 %v30
    %v98 = vpop.f32.mrb[0].mxu0
    %v99 = vadd.f32 %v26, %v98
    %v100 = vpop.f32.mrb[0].mxu0
    %101 = vdwg.mxu0
    %v102 = vmax.f32 %v99, 0.0
    %v103 = vld [vmem:[%s3] sm:$0xff]
    %v104 = vld [vmem:[%s3 + $0x8] sm:$0xff]
    %v105 = vld [vmem:[%s3 + $0x10] sm:$0xff]
    %v106 = vld [vmem:[%s3 + $0x18] sm:$0xff]
    %v107 = vld [vmem:[%s3 + $0x20] sm:$0xff]
    %v108 = vld [vmem:[%s3 + $0x28] sm:$0xff]
    %v109 = vld [vmem:[%s3 + $0x30] sm:$0xff]
    %v110 = vld [vmem:[%s3 + $0x38] sm:$0xff]
    %v111 = vld [vmem:[%s3 + $0x40] sm:$0xff]
    %v112 = vld [vmem:[%s3 + $0x48] sm:$0xff]
    %v113 = vld [vmem:[%s3 + $0x50] sm:$0xff]
    %v114 = vld [vmem:[%s3 + $0x58] sm:$0xff]
    %v115 = vld [vmem:[%s3 + $0x60] sm:$0xff]
    %v116 = vld [vmem:[%s3 + $0x68] sm:$0xff]
    %v117 = vld [vmem:[%s3 + $0x70] sm:$0xff]
    %v118 = vld [vmem:[%s3 + $0x78] sm:$0xff]
    %119 = vmatprep.subr.mxu0 0.0
    %120 = vmatpush1.msra.mxu0 %v103
    %121 = vmatprep.subr.mxu0 0.0
    %122 = vmatpush1.msra.mxu0 %v104
    %123 = vmatprep.subr.mxu0 0.0
    %124 = vmatpush1.msra.mxu0 %v105
    %125 = vmatprep.subr.mxu0 0.0
    %126 = vmatpush1.msra.mxu0 %v106
    %127 = vmatprep.subr.mxu0 0.0
    %128 = vmatpush1.msra.mxu0 %v107
    %129 = vmatprep.subr.mxu0 0.0
    %130 = vmatpush1.msra.mxu0 %v108
    %131 = vmatprep.subr.mxu0 0.0
    %132 = vmatpush1.msra.mxu0 %v109
    %133 = vmatprep.subr.mxu0 0.0
    %134 = vmatpush1.msra.mxu0 %v110
    %135 = vmatprep.subr.mxu0 0.0
    %136 = vmatpush1.msra.mxu0 %v111
    %137 = vmatprep.subr.mxu0 0.0
    %138 = vmatpush1.msra.mxu0 %v112
    %139 = vmatprep.subr.mxu0 0.0
    %140 = vmatpush1.msra.mxu0 %v113
    %141 = vmatprep.subr.mxu0 0.0
    %142 = vmatpush1.msra.mxu0 %v114
    %143 = vmatprep.subr.mxu0 0.0
    %144 = vmatpush1.msra.mxu0 %v115
    %145 = vmatprep.subr.mxu0 0.0
    %146 = vmatpush1.msra.mxu0 %v116
    %147 = vmatprep.subr.mxu0 0.0
    %148 = vmatpush1.msra.mxu0 %v117
    %149 = vmatprep.subr.mxu0 0.0
    %150 = vmatpush1.msra.mxu0 %v118
    %151 = vmatprep.subr.mxu0 0.0
    %152 = vmatpush1.msra.mxu0 0.0
    %153 = vmatprep.subr.mxu0 0.0
    %154 = vmatpush1.msra.mxu0 0.0
    %155 = vmatprep.subr.mxu0 0.0
    %156 = vmatpush1.msra.mxu0 0.0
    %157 = vmatprep.subr.mxu0 0.0
    %158 = vmatpush1.msra.mxu0 0.0
    %159 = vmatprep.subr.mxu0 0.0
    %160 = vmatpush1.msra.mxu0 0.0
    %161 = vmatprep.subr.mxu0 0.0
    %162 = vmatpush1.msra.mxu0 0.0
    %163 = vmatprep.subr.mxu0 0.0
    %164 = vmatpush1.msra.mxu0 0.0
    %165 = vmatprep.subr.mxu0 0.0
    %166 = vmatpush1.msra.mxu0 0.0
    %167 = vmatprep.subr.mxu0 0.0
    %168 = vmatpush1.msra.mxu0 0.0
    %169 = vmatprep.subr.mxu0 0.0
    %170 = vmatpush1.msra.mxu0 0.0
    %171 = vmatprep.subr.mxu0 0.0
    %172 = vmatpush1.msra.mxu0 0.0
    %173 = vmatprep.subr.mxu0 0.0
    %174 = vmatpush1.msra.mxu0 0.0
    %175 = vmatprep.subr.mxu0 0.0
    %176 = vmatpush1.msra.mxu0 0.0
    %177 = vmatprep.subr.mxu0 0.0
    %178 = vmatpush1.msra.mxu0 0.0
    %179 = vmatprep.subr.mxu0 0.0
    %180 = vmatpush1.msra.mxu0 0.0
    %181 = vmatprep.subr.mxu0 0.0
    %182 = vmatpush1.msra.mxu0 0.0
    %183 = vmatprep.mubr.f32.mxu0 0.0
    %184 = vmatmul.mubr.f32.gmra.mrb[0].mxu0 %v102
    %v185 = vpop.f32.mrb[0].mxu0
    %v186 = vadd.f32 0.0, %v185
    %v187 = vpop.f32.mrb[0].mxu0
    %188 = vdwg.mxu0
    %vm189 = vcmask 97280
    %190 = vst.msk [vmem:[#allocation2] sm:$0xff] %vm189, %v186
    // Predicated region
    $region18: #{tpu_custom_call.1} parent=1 // pred_check
      _
    $region19: #{tpu_custom_call.1} parent=1 // pred_check_branch
      %192 = sbr.rel (0) target = $region21
    $region20: #{tpu_custom_call.1} parent=1 // pred_region
      %s194 = ssub.s32 128, 128
      %195 = vsyncadd [#allocation3], %s194
      %s197 = sshll.u32 [#allocation2], 4
      %s198 = int_to_ptr.vmem [resolvable:$true] %s197
      %200 = dma.vmem_to_hbm [thread:$0]  %s198, 128, %s4, [#allocation3]
    $region21: #{tpu_custom_call.1} parent=1 // pred_fallthru
      _
    // Predicated region
    $region22: #{tpu_custom_call.1} parent=1 // pred_check
      _
    $region23: #{tpu_custom_call.1} parent=1 // pred_check_branch
      %202 = sbr.rel (0) target = $region25
    $region24: #{tpu_custom_call.1} parent=1 // pred_region
      %203 = dma.done [#allocation3], 128
    $region25: #{tpu_custom_call.1} parent=1 // pred_fallthru
      _
    %204 = vsyncpa [#allocation3], 1

</llo_original>
